<compile_context>
chip_gen: v5e
topology: v5e:2x2
jax: 0.10.0
libtpu: 0.0.40
codegen_flags: <defaults>
</compile_context>

<pallas_src>
import jax
import jax.numpy as jnp
from jax.experimental import pallas as pl
from jax.experimental.pallas import tpu as pltpu

C_IN, C_OUT, K, PAD = 3, 5, 7, 3
FC_OUT = 3
F32_SUBLANE = 8          # f32 sublane quantum (second-minor block dim multiple)
MAX_TILE_N = 2048        # keeps double-buffered blocks << v5e 16 MiB scoped VMEM
PALLAS_MIN_ROWS = 1024   # below this, kernel-launch overhead dominates the ~100 FLOPs


def _round_up(a, b):
    return (a + b - 1) // b * b


def _cdiv(a, b):
    return (a + b - 1) // b


def _pick_tile_n(n):
    """Batch tile: <= MAX_TILE_N rows, multiple of 8, minimal batch padding."""
    n8 = _round_up(max(n, 1), F32_SUBLANE)
    num_tiles = _cdiv(n8, MAX_TILE_N)
    return _round_up(_cdiv(n8, num_tiles), F32_SUBLANE)


def _cnn_kernel(x_ref, w1_ref, b1_ref, w2_ref, b2_ref, o_ref):
    # x_ref: (tile_n, 3)   w1_ref: (3, 5)   b1_ref: (1, 5)
    # w2_ref: (5, 3)       b2_ref: (1, 3)   o_ref: (tile_n, 3)
    # Center-tap conv == (tile_n,3)@(3,5); MXU zero-extends the narrow dims.
    h = jnp.dot(x_ref[...], w1_ref[...], preferred_element_type=jnp.float32)
    h = jnp.maximum(h + b1_ref[...], 0.0)               # conv bias + ReLU
    y = jnp.dot(h, w2_ref[...], preferred_element_type=jnp.float32) + b2_ref[...]
    o_ref[...] = y.astype(o_ref.dtype)


def simple_cnn_forward(x, conv_w, conv_b, fc_w, fc_b, *, use_pallas=None):
    """x: (N, 3, 1, 1) NCHW. Returns (N, 3)."""
    n, c, h, w = x.shape
    assert c == C_IN and h == 1 and w == 1, "fc1(in=5) implies 1x1 spatial input"

    dt = jnp.float32
    x2d = x.reshape(n, C_IN).astype(dt)                  # (N, 3)
    w1 = conv_w[:, :, PAD, PAD].T.astype(dt)             # (3, 5) center tap
    b1 = conv_b.reshape(1, C_OUT).astype(dt)             # (1, 5)
    w2 = fc_w.T.astype(dt)                               # (5, 3)
    b2 = fc_b.reshape(1, FC_OUT).astype(dt)              # (1, 3)

    if use_pallas is None:
        use_pallas = n >= PALLAS_MIN_ROWS
    if not use_pallas:
        # Small-N fast path: launch overhead >> ~16 FLOPs/row of real work.
        hid = jnp.maximum(x2d @ w1 + b1, 0.0)
        return hid @ w2 + b2

    tile_n = _pick_tile_n(n)
    n_pad = _round_up(n, tile_n)
    if n_pad != n:
        x2d = jnp.pad(x2d, ((0, n_pad - n), (0, 0)))

    grid = (n_pad // tile_n,)
    # Real (unpadded) work so XLA treats this as the trivial op it is.
    flops = 2 * n * (C_IN * C_OUT + C_OUT * FC_OUT)
    bytes_accessed = 4 * (n * (C_IN + FC_OUT)
                          + w1.size + b1.size + w2.size + b2.size)

    out = pl.pallas_call(
        _cnn_kernel,
        out_shape=jax.ShapeDtypeStruct((n_pad, FC_OUT), dt),
        grid_spec=pltpu.PrefetchScalarGridSpec(
            num_scalar_prefetch=0,
            grid=grid,
            in_specs=[
                pl.BlockSpec((tile_n, C_IN), lambda i: (i, 0)),     # x tile (narrow)
                pl.BlockSpec((C_IN, C_OUT), lambda i: (0, 0)),      # conv center-tap W
                pl.BlockSpec((1, C_OUT), lambda i: (0, 0)),         # conv bias
                pl.BlockSpec((C_OUT, FC_OUT), lambda i: (0, 0)),    # fc weight
                pl.BlockSpec((1, FC_OUT), lambda i: (0, 0)),        # fc bias
            ],
            out_specs=pl.BlockSpec((tile_n, FC_OUT), lambda i: (i, 0)),
        ),
        compiler_params=pltpu.CompilerParams(
            dimension_semantics=("parallel",)),
        cost_estimate=pl.CostEstimate(
            flops=flops, transcendentals=0, bytes_accessed=bytes_accessed),
    )(x2d, w1, b1, w2, b2)

    return out[:n]                                       # drop batch padding only


def _reference_forward(x, conv_w, conv_b, fc_w, fc_b):
    # Pure-JAX reference with the full 7x7 convolution, for verification.
    y = jax.lax.conv_general_dilated(
        x, conv_w, window_strides=(1, 1), padding=((PAD, PAD), (PAD, PAD)),
        dimension_numbers=("NCHW", "OIHW", "NCHW"))
    y = y + conv_b.reshape(1, C_OUT, 1, 1)
    y = jnp.maximum(y, 0.0)
    y = y.reshape(y.shape[0], -1)                        # (N, 5)
    return y @ fc_w.T + fc_b


if __name__ == "__main__":
    key = jax.random.PRNGKey(0)
    k_x, k_cw, k_cb, k_fw, k_fb, k_x2, k_x3 = jax.random.split(key, 7)

    # Deterministic parameters (uniform, roughly PyTorch fan-in scale).
    bound_conv = 1.0 / (C_IN * K * K) ** 0.5
    conv_w = jax.random.uniform(k_cw, (C_OUT, C_IN, K, K), jnp.float32,
                                -bound_conv, bound_conv)
    conv_b = jax.random.uniform(k_cb, (C_OUT,), jnp.float32,
                                -bound_conv, bound_conv)
    bound_fc = 1.0 / C_OUT ** 0.5
    fc_w = jax.random.uniform(k_fw, (FC_OUT, C_OUT), jnp.float32,
                              -bound_fc, bound_fc)
    fc_b = jax.random.uniform(k_fb, (FC_OUT,), jnp.float32,
                              -bound_fc, bound_fc)

    # Small batch, forced through the Pallas kernel (single 8-row tile).
    N = 2
    x = jax.random.normal(k_x, (N, C_IN, 1, 1), dtype=jnp.float32)
    out = jax.block_until_ready(
        simple_cnn_forward(x, conv_w, conv_b, fc_w, fc_b, use_pallas=True))
    ref = _reference_forward(x, conv_w, conv_b, fc_w, fc_b)
    assert out.shape == (N, FC_OUT)
    assert jnp.allclose(out, ref, atol=1e-5, rtol=1e-5), "mismatch (pallas, N=2)"

    # Auto path for tiny N uses the fused-XLA bypass; must match too.
    out_fast = jax.block_until_ready(
        simple_cnn_forward(x, conv_w, conv_b, fc_w, fc_b))
    assert jnp.allclose(out_fast, ref, atol=1e-5, rtol=1e-5), "mismatch (fast, N=2)"

    # Medium batch: single 640-row tile, no padding.
    N2 = 640
    x2 = jax.random.normal(k_x2, (N2, C_IN, 1, 1), dtype=jnp.float32)
    out2 = jax.block_until_ready(
        simple_cnn_forward(x2, conv_w, conv_b, fc_w, fc_b, use_pallas=True))
    ref2 = _reference_forward(x2, conv_w, conv_b, fc_w, fc_b)
    assert out2.shape == (N2, FC_OUT)
    assert jnp.allclose(out2, ref2, atol=1e-5, rtol=1e-5), "mismatch (pallas, N=640)"

    # Larger batch: multi-step parallel grid (3 tiles of 1368 rows) with a
    # padded tail, exercising the pipelined / megacore path.
    N3 = 4100
    x3 = jax.random.normal(k_x3, (N3, C_IN, 1, 1), dtype=jnp.float32)
    out3 = jax.block_until_ready(
        simple_cnn_forward(x3, conv_w, conv_b, fc_w, fc_b, use_pallas=True))
    ref3 = _reference_forward(x3, conv_w, conv_b, fc_w, fc_b)
    assert out3.shape == (N3, FC_OUT)
    assert jnp.allclose(out3, ref3, atol=1e-5, rtol=1e-5), "mismatch (pallas, N=4100)"

    print("KERNEL_OK")
</pallas_src>

<mosaic_0001>
module attributes {stable_mosaic.version = 11 : i64} {
  func.func @_cnn_kernel(%arg0: i32, %arg1: memref<8x3xf32, #tpu.memory_space<vmem>>, %arg2: memref<3x5xf32, #tpu.memory_space<vmem>>, %arg3: memref<1x5xf32, #tpu.memory_space<vmem>>, %arg4: memref<5x3xf32, #tpu.memory_space<vmem>>, %arg5: memref<1x3xf32, #tpu.memory_space<vmem>>, %arg6: memref<8x3xf32, #tpu.memory_space<vmem>>) attributes {dimension_semantics = [#tpu.dimension_semantics<parallel>], iteration_bounds = array<i64: 1>, scalar_prefetch = 0 : i64, scratch_operands = 0 : i64, tpu.core_type = #tpu.core_type<tc>, window_params = [{transform_indices = @transform_0, window_bounds = array<i64: 8, 3>}, {pipeline_mode = #tpu.pipeline_mode<synchronous>, transform_indices = @transform_1, window_bounds = array<i64: 3, 5>}, {pipeline_mode = #tpu.pipeline_mode<synchronous>, transform_indices = @transform_2, window_bounds = array<i64: 1, 5>}, {pipeline_mode = #tpu.pipeline_mode<synchronous>, transform_indices = @transform_3, window_bounds = array<i64: 5, 3>}, {pipeline_mode = #tpu.pipeline_mode<synchronous>, transform_indices = @transform_4, window_bounds = array<i64: 1, 3>}, {transform_indices = @transform_5, window_bounds = array<i64: 8, 3>}]} {
    %c0 = arith.constant 0 : index
    %c0_0 = arith.constant 0 : index
    %0 = vector.load %arg1[%c0, %c0_0] : memref<8x3xf32, #tpu.memory_space<vmem>>, vector<8x3xf32>
    %c0_1 = arith.constant 0 : index
    %c0_2 = arith.constant 0 : index
    %1 = vector.load %arg2[%c0_1, %c0_2] : memref<3x5xf32, #tpu.memory_space<vmem>>, vector<3x5xf32>
    %cst = arith.constant dense<0.000000e+00> : vector<8x5xf32>
    %2 = tpu.matmul %0, %1, %cst {dimension_numbers = #tpu.dot_dimension_numbers<[1], [0], [0], [1], [0, 0, 1, 1], [], []>} : vector<8x3xf32>, vector<3x5xf32>, vector<8x5xf32> -> vector<8x5xf32>
    %c0_3 = arith.constant 0 : index
    %c0_4 = arith.constant 0 : index
    %3 = vector.load %arg3[%c0_3, %c0_4] : memref<1x5xf32, #tpu.memory_space<vmem>>, vector<1x5xf32>
    %4 = vector.broadcast %3 : vector<1x5xf32> to vector<8x5xf32>
    %5 = arith.addf %2, %4 : vector<8x5xf32>
    %cst_5 = arith.constant 0.000000e+00 : f32
    %6 = vector.broadcast %cst_5 : f32 to vector<8x5xf32>
    %7 = arith.maximumf %5, %6 : vector<8x5xf32>
    %c0_6 = arith.constant 0 : index
    %c0_7 = arith.constant 0 : index
    %8 = vector.load %arg4[%c0_6, %c0_7] : memref<5x3xf32, #tpu.memory_space<vmem>>, vector<5x3xf32>
    %cst_8 = arith.constant dense<0.000000e+00> : vector<8x3xf32>
    %9 = tpu.matmul %7, %8, %cst_8 {dimension_numbers = #tpu.dot_dimension_numbers<[1], [0], [0], [1], [0, 0, 1, 1], [], []>} : vector<8x5xf32>, vector<5x3xf32>, vector<8x3xf32> -> vector<8x3xf32>
    %c0_9 = arith.constant 0 : index
    %c0_10 = arith.constant 0 : index
    %10 = vector.load %arg5[%c0_9, %c0_10] : memref<1x3xf32, #tpu.memory_space<vmem>>, vector<1x3xf32>
    %11 = vector.broadcast %10 : vector<1x3xf32> to vector<8x3xf32>
    %12 = arith.addf %9, %11 : vector<8x3xf32>
    %c0_11 = arith.constant 0 : index
    %c0_12 = arith.constant 0 : index
    %13 = vector.load %arg6[%c0_11, %c0_12] : memref<8x3xf32, #tpu.memory_space<vmem>>, vector<8x3xf32>
    tpu.vector_store %arg6[%c0_11, %c0_12], %12 {strides = array<i32>} : memref<8x3xf32, #tpu.memory_space<vmem>>, vector<8x3xf32>,
    return
  }
  func.func @transform_0(%arg0: i32) -> (i32, i32) {
    %c0_i32 = arith.constant 0 : i32
    %c0_i32_0 = arith.constant 0 : i32
    return %arg0, %c0_i32 : i32, i32
  }
  func.func @transform_1(%arg0: i32) -> (i32, i32) {
    %c0_i32 = arith.constant 0 : i32
    %c0_i32_0 = arith.constant 0 : i32
    %c0_i32_1 = arith.constant 0 : i32
    return %c0_i32, %c0_i32_0 : i32, i32
  }
  func.func @transform_2(%arg0: i32) -> (i32, i32) {
    %c0_i32 = arith.constant 0 : i32
    %c0_i32_0 = arith.constant 0 : i32
    %c0_i32_1 = arith.constant 0 : i32
    return %c0_i32, %c0_i32_0 : i32, i32
  }
  func.func @transform_3(%arg0: i32) -> (i32, i32) {
    %c0_i32 = arith.constant 0 : i32
    %c0_i32_0 = arith.constant 0 : i32
    %c0_i32_1 = arith.constant 0 : i32
    return %c0_i32, %c0_i32_0 : i32, i32
  }
  func.func @transform_4(%arg0: i32) -> (i32, i32) {
    %c0_i32 = arith.constant 0 : i32
    %c0_i32_0 = arith.constant 0 : i32
    %c0_i32_1 = arith.constant 0 : i32
    return %c0_i32, %c0_i32_0 : i32, i32
  }
  func.func @transform_5(%arg0: i32) -> (i32, i32) {
    %c0_i32 = arith.constant 0 : i32
    %c0_i32_0 = arith.constant 0 : i32
    return %arg0, %c0_i32 : i32, i32
  }
}

</mosaic_0001>

<llo_original>
// kernel: tpu_custom_call.1
$region0: #{tpu_custom_call.1}
  #allocation0 [shape = 'u32[]', space=smem, size = 0x4, offset = 0x4, fixed_abs, tag = 'smem constant byte address 0x4 - core index']
  #allocation1 [shape = 'u32[72,128]{1,0:T(1,128)}', space=vmem, size = 0x9000, scoped, tag = 'internal scratch']
  %s0 = inlined_call_operand.vmem [shape: f32[8,3], index: 0, kind: input, shape index: {}]
  %s1 = inlined_call_operand.vmem [shape: f32[3,5], index: 1, kind: input, shape index: {}]
  %s2 = inlined_call_operand.vmem [shape: f32[1,5], index: 2, kind: input, shape index: {}]
  %s3 = inlined_call_operand.vmem [shape: f32[5,3], index: 3, kind: input, shape index: {}]
  %s4 = inlined_call_operand.vmem [shape: f32[1,3], index: 4, kind: input, shape index: {}]
  %s5 = inlined_call_operand.vmem [shape: f32[8,3], index: 5, kind: output, shape index: {}]
  %s6 = sld [smem:[#allocation0]]
  $region30: #{tpu_custom_call.1} parent=0
    _
  %s8 = ssub.s32 1, %s6
  %s9 = scalar_select 0, %s8, %s6
  // Predicated region
  $region2: #{tpu_custom_call.1} parent=0 // pred_check
    _
  $region3: #{tpu_custom_call.1} parent=0 // pred_check_branch
    %11 = sbr.rel (0) target = $region5
  $region4: #{tpu_custom_call.1} parent=0 // pred_region
    _
  $region5: #{tpu_custom_call.1} parent=0 // pred_fallthru
    _
  // Predicated region
  $region6: #{tpu_custom_call.1} parent=0 // pred_check
    _
  $region7: #{tpu_custom_call.1} parent=0 // pred_check_branch
    %13 = sbr.rel (0) target = $region9
  $region8: #{tpu_custom_call.1} parent=0 // pred_region
    _
  $region9: #{tpu_custom_call.1} parent=0 // pred_fallthru
    _
  // Predicated region
  $region10: #{tpu_custom_call.1} parent=0 // pred_check
    _
  $region11: #{tpu_custom_call.1} parent=0 // pred_check_branch
    %15 = sbr.rel (0) target = $region13
  $region12: #{tpu_custom_call.1} parent=0 // pred_region
    _
  $region13: #{tpu_custom_call.1} parent=0 // pred_fallthru
    _
  // Predicated region
  $region14: #{tpu_custom_call.1} parent=0 // pred_check
    _
  $region15: #{tpu_custom_call.1} parent=0 // pred_check_branch
    %17 = sbr.rel (0) target = $region17
  $region16: #{tpu_custom_call.1} parent=0 // pred_region
    _
  $region17: #{tpu_custom_call.1} parent=0 // pred_fallthru
    _
  // Predicated region
  $region18: #{tpu_custom_call.1} parent=0 // pred_check
    _
  $region19: #{tpu_custom_call.1} parent=0 // pred_check_branch
    %19 = sbr.rel (0) target = $region21
  $region20: #{tpu_custom_call.1} parent=0 // pred_region
    _
  $region21: #{tpu_custom_call.1} parent=0 // pred_fallthru
    _
  %v20 = vld [vmem:[%s0] sm:$0xff]
  %v21 = vld [vmem:[%s1] sm:$0x7]
  %v22 = vld [vmem:[%s2] sm:$0x1]
  %v24 = vperm.slane %v22, 0
  %vm26 = vcmask 23552
  %v28 = vsel %vm26, %v20, 0
  %vm30 = vcmask 1042432
  %v32 = vsel %vm30, %v21, 0
  %34 = vmatpush.msra.mxu0 0.0
  %35 = vmatpush.msra.mxu0 0.0
  %36 = vmatpush.msra.mxu0 0.0
  %37 = vmatpush.msra.mxu0 0.0
  %38 = vmatpush.msra.mxu0 0.0
  %39 = vmatpush.msra.mxu0 0.0
  %40 = vmatpush.msra.mxu0 0.0
  %41 = vmatpush.msra.mxu0 0.0
  %42 = vmatpush.msra.mxu0 0.0
  %43 = vmatpush.msra.mxu0 0.0
  %44 = vmatpush.msra.mxu0 0.0
  %45 = vmatpush.msra.mxu0 0.0
  %46 = vmatpush.msra.mxu0 0.0
  %47 = vmatpush.msra.mxu0 0.0
  %48 = vmatpush.msra.mxu0 0.0
  %49 = vmatpush.msra.mxu0 %v32
  %50 = vmatmul.f32.gmra.mxu0 %v28
  %v51 = vpop.f32.mrf.mxu0
  %v52 = vadd.f32 %v24, %v51
  %53 = vdwg.mxu0
  %v54 = vmax.f32 %v52, 0.0
  %v55 = vld [vmem:[%s3] sm:$0x1f]
  %v56 = vld [vmem:[%s4] sm:$0x1]
  %v58 = vperm.slane %v56, 0
  %vm60 = vcmask 39936
  %v62 = vsel %vm60, %v54, 0
  %vm64 = vcmask 1044480
  %v66 = vsel %vm64, %v55, 0
  %68 = vmatpush.msra.mxu0 0.0
  %69 = vmatpush.msra.mxu0 0.0
  %70 = vmatpush.msra.mxu0 0.0
  %71 = vmatpush.msra.mxu0 0.0
  %72 = vmatpush.msra.mxu0 0.0
  %73 = vmatpush.msra.mxu0 0.0
  %74 = vmatpush.msra.mxu0 0.0
  %75 = vmatpush.msra.mxu0 0.0
  %76 = vmatpush.msra.mxu0 0.0
  %77 = vmatpush.msra.mxu0 0.0
  %78 = vmatpush.msra.mxu0 0.0
  %79 = vmatpush.msra.mxu0 0.0
  %80 = vmatpush.msra.mxu0 0.0
  %81 = vmatpush.msra.mxu0 0.0
  %82 = vmatpush.msra.mxu0 0.0
  %83 = vmatpush.msra.mxu0 %v66
  %84 = vmatmul.f32.gmra.mxu0 %v62
  %v85 = vpop.f32.mrf.mxu0
  %v86 = vadd.f32 %v58, %v85
  %87 = vdwg.mxu0
  %88 = vst.msk [vmem:[%s5] sm:$0xff] %vm26, %v86
  // Predicated region
  $region22: #{tpu_custom_call.1} parent=0 // pred_check
    _
  $region23: #{tpu_custom_call.1} parent=0 // pred_check_branch
    %90 = sbr.rel (0) target = $region25
  $region24: #{tpu_custom_call.1} parent=0 // pred_region
    _
  $region25: #{tpu_custom_call.1} parent=0 // pred_fallthru
    _
  // Predicated region
  $region26: #{tpu_custom_call.1} parent=0 // pred_check
    _
  $region27: #{tpu_custom_call.1} parent=0 // pred_check_branch
    %92 = sbr.rel (0) target = $region29
  $region28: #{tpu_custom_call.1} parent=0 // pred_region
    _
  $region29: #{tpu_custom_call.1} parent=0 // pred_fallthru
    _

</llo_original>
